<compile_context>
chip_gen: v7x
topology: tpu7x:2x2x1
jax: 0.10.0
libtpu: 0.0.40
codegen_flags: <defaults>
</compile_context>

<pallas_src>
import functools

import jax
import jax.numpy as jnp
from jax import lax
from jax.experimental import pallas as pl
from jax.experimental.pallas import tpu as pltpu


def _hinge_kernel(x_ref, y_ref, o_ref, *, total_rows):
    x = x_ref[...]                      # (tb, C), native dtype (no f32 tile upcast)
    y = y_ref[...]                      # (tb, 1) int32
    tb, c = x.shape

    # (1, C) class iota broadcast against (tb, 1) labels -> (tb, C) one-hot mask.
    cls = lax.broadcasted_iota(jnp.int32, (1, c), 1)
    is_true = cls == y

    neg_inf = jnp.asarray(-jnp.inf, dtype=x.dtype)
    # True-class score gathered via masked max (no 0*inf NaN hazard).
    x_true = jnp.max(jnp.where(is_true, x, neg_inf), axis=1, keepdims=True)
    # Max over the *other* classes; +1 margin and outer max are (tb, 1) ops.
    m_other = jnp.max(jnp.where(is_true, neg_inf, x), axis=1, keepdims=True)

    x_true_f = x_true.astype(jnp.float32)
    m_other_f = m_other.astype(jnp.float32)
    loss_rows = jnp.maximum(m_other_f + jnp.float32(1.0), x_true_f) - x_true_f

    # Zero padded tail rows (only traced when B % tb != 0); garbage/NaN in the
    # padded region is dropped by the select, never summed.
    if total_rows % tb != 0:
        row = pl.program_id(0) * tb + lax.broadcasted_iota(jnp.int32, (tb, 1), 0)
        loss_rows = jnp.where(row < total_rows, loss_rows, jnp.float32(0.0))

    partial = jnp.sum(loss_rows)                     # scalar f32 per tile
    # Lane-dense, unmasked (1, 8, 128) store of the per-tile partial sum.
    o_ref[...] = jnp.full(o_ref.shape, partial, dtype=o_ref.dtype)


def multi_class_hinge_loss(x: jax.Array, y: jax.Array, *, tb: int | None = None) -> jax.Array:
    """x: (B, C) scores (any float dtype), y: (B,) int class indices. Returns scalar f32."""
    B, C = x.shape
    itemsize = jnp.dtype(x.dtype).itemsize
    row_bytes = C * itemsize
    # Sublane packing of the input dtype: f32 -> 8, bf16 -> 16, int8/fp8 -> 32.
    sub = {4: 8, 2: 16, 1: 32}.get(itemsize, 8)

    TARGET_BLOCK_BYTES = 4 * 1024 * 1024   # ~4 MiB x-block: amortizes ~0.35us/step
    MAX_BLOCK_BYTES = 8 * 1024 * 1024      # clamp so 2x-buffered block fits 32 MiB VMEM
    MIN_TILES = 8                          # soft target: keep both v7x TCs busy

    if tb is None:
        tb_budget = max(1, TARGET_BLOCK_BYTES // row_bytes)
        tb_split = -(-B // MIN_TILES)      # ceil(B / MIN_TILES)
        tb = min(tb_budget, tb_split)
    tb = int(tb)
    tb = ((max(1, tb) + sub - 1) // sub) * sub           # sublane-pack aligned
    tb = min(tb, ((B + sub - 1) // sub) * sub)           # no larger than padded batch
    tb = min(tb, max(sub, (MAX_BLOCK_BYTES // row_bytes) // sub * sub))

    y2d = y.astype(jnp.int32).reshape(B, 1)
    num_tiles = pl.cdiv(B, tb)

    kernel = functools.partial(_hinge_kernel, total_rows=B)

    cost = pl.CostEstimate(
        flops=5 * B * C,
        transcendentals=0,
        bytes_accessed=B * C * itemsize + B * 4 + num_tiles * 8 * 128 * 4,
    )

    partials = pl.pallas_call(
        kernel,
        out_shape=jax.ShapeDtypeStruct((num_tiles, 8, 128), jnp.float32),
        grid=(num_tiles,),
        in_specs=[
            pl.BlockSpec((tb, C), lambda i: (i, 0)),
            pl.BlockSpec((tb, 1), lambda i: (i, 0)),
        ],
        out_specs=pl.BlockSpec((1, 8, 128), lambda i: (i, 0, 0)),
        compiler_params=pltpu.CompilerParams(
            dimension_semantics=("parallel",),
            vmem_limit_bytes=32 * 1024 * 1024,
        ),
        cost_estimate=cost,
    )(x, y2d)

    # Tiny final reduction over per-tile partial sums; single division by B.
    return jnp.sum(partials[:, 0, 0]) / jnp.float32(B)


def _reference(x, y):
    B, C = x.shape
    x = x.astype(jnp.float32)
    rng = jnp.arange(C)[None, :]
    delta = (y[:, None] != rng).astype(jnp.float32)
    aug = x + delta - jnp.take_along_axis(x, y[:, None], axis=1)
    y_star = jnp.argmax(aug, axis=1)
    xi = (y_star[:, None] == rng).astype(jnp.float32)
    return jnp.sum(aug * xi) / B


if __name__ == "__main__":
    key = jax.random.PRNGKey(0)
    kx, ky = jax.random.split(key)

    B, C = 60, 128          # B deliberately not a tile multiple -> exercises padded tail rows
    x = jax.random.normal(kx, (B, C), dtype=jnp.float32)
    y = jax.random.randint(ky, (B,), 0, C, dtype=jnp.int32)

    ref = _reference(x, y)

    # Multi-step grid (tb=16 -> 4 batch tiles, the last one partial).
    loss = multi_class_hinge_loss(x, y, tb=16)
    jax.block_until_ready(loss)
    assert jnp.allclose(loss, ref, atol=1e-5, rtol=1e-5), (loss, ref)

    # Auto tile size (8 tiles of 8 rows at this small shape, last one partial).
    loss_auto = multi_class_hinge_loss(x, y)
    jax.block_until_ready(loss_auto)
    assert jnp.allclose(loss_auto, ref, atol=1e-5, rtol=1e-5), (loss_auto, ref)

    # Native-dtype path: bf16 streamed and reduced in bf16, f32 only on (tb,1) maxima.
    x_bf16 = x.astype(jnp.bfloat16)
    loss_bf16 = multi_class_hinge_loss(x_bf16, y, tb=16)
    jax.block_until_ready(loss_bf16)
    ref_bf16 = _reference(x_bf16.astype(jnp.float32), y)
    assert jnp.allclose(loss_bf16, ref_bf16, atol=1e-4, rtol=1e-4), (loss_bf16, ref_bf16)

    print("KERNEL_OK")
</pallas_src>

<mosaic_0001>
module attributes {stable_mosaic.version = 11 : i64} {
  func.func @_hinge_kernel(%arg0: i32, %arg1: memref<16x128xf32, #tpu.memory_space<vmem>>, %arg2: memref<16x1xi32, #tpu.memory_space<vmem>>, %arg3: memref<1x8x128xf32, #tpu.memory_space<vmem>>) attributes {dimension_semantics = [#tpu.dimension_semantics<parallel>], iteration_bounds = array<i64: 4>, scalar_prefetch = 0 : i64, scratch_operands = 0 : i64, tpu.core_type = #tpu.core_type<tc>, window_params = [{transform_indices = @transform_0, window_bounds = array<i64: 16, 128>}, {transform_indices = @transform_1, window_bounds = array<i64: 16, 1>}, {transform_indices = @transform_2, window_bounds = array<i64: 1, 8, 128>}]} {
    %c0 = arith.constant 0 : index
    %c0_0 = arith.constant 0 : index
    %0 = vector.load %arg1[%c0, %c0_0] : memref<16x128xf32, #tpu.memory_space<vmem>>, vector<16x128xf32>
    %c0_1 = arith.constant 0 : index
    %c0_2 = arith.constant 0 : index
    %1 = vector.load %arg2[%c0_1, %c0_2] : memref<16x1xi32, #tpu.memory_space<vmem>>, vector<16x1xi32>
    %2 = tpu.iota {dimensions = array<i32: 1>} : vector<1x128xi32>
    %3 = vector.broadcast %2 : vector<1x128xi32> to vector<16x128xi32>
    %4 = vector.broadcast %1 : vector<16x1xi32> to vector<16x128xi32>
    %5 = arith.cmpi eq, %3, %4 : vector<16x128xi32>
    %cst = arith.constant 0xFF800000 : f32
    %6 = vector.broadcast %cst : f32 to vector<16x128xf32>
    %7 = arith.select %5, %0, %6 : vector<16x128xi1>, vector<16x128xf32>
    %cst_3 = arith.constant dense<0xFF800000> : vector<16xf32>
    %8 = vector.multi_reduction <maximumf>, %7, %cst_3 [1] : vector<16x128xf32> to vector<16xf32>
    %9 = vector.shape_cast %8 : vector<16xf32> to vector<16x1xf32>
    %cst_4 = arith.constant 0xFF800000 : f32
    %10 = vector.broadcast %cst_4 : f32 to vector<16x128xf32>
    %11 = arith.select %5, %10, %0 : vector<16x128xi1>, vector<16x128xf32>
    %cst_5 = arith.constant dense<0xFF800000> : vector<16xf32>
    %12 = vector.multi_reduction <maximumf>, %11, %cst_5 [1] : vector<16x128xf32> to vector<16xf32>
    %13 = vector.shape_cast %12 : vector<16xf32> to vector<16x1xf32>
    %cst_6 = arith.constant 1.000000e+00 : f32
    %14 = vector.broadcast %cst_6 : f32 to vector<16x1xf32>
    %15 = arith.addf %13, %14 : vector<16x1xf32>
    %16 = arith.maximumf %15, %9 : vector<16x1xf32>
    %17 = arith.subf %16, %9 : vector<16x1xf32>
    %c16_i32 = arith.constant 16 : i32
    %18 = arith.muli %arg0, %c16_i32 : i32
    %19 = tpu.iota {dimensions = array<i32: 0>} : vector<16x1xi32>
    %20 = vector.broadcast %18 : i32 to vector<16x1xi32>
    %21 = arith.addi %20, %19 : vector<16x1xi32>
    %c60_i32 = arith.constant 60 : i32
    %22 = vector.broadcast %c60_i32 : i32 to vector<16x1xi32>
    %23 = arith.cmpi slt, %21, %22 : vector<16x1xi32>
    %cst_7 = arith.constant 0.000000e+00 : f32
    %24 = vector.broadcast %cst_7 : f32 to vector<16x1xf32>
    %25 = arith.select %23, %17, %24 : vector<16x1xi1>, vector<16x1xf32>
    %26 = vector.shape_cast %25 : vector<16x1xf32> to vector<1x16x1xf32>
    %cst_8 = arith.constant dense<0.000000e+00> : vector<1xf32>
    %27 = vector.multi_reduction <add>, %26, %cst_8 [1, 2] : vector<1x16x1xf32> to vector<1xf32>
    %28 = vector.shape_cast %27 : vector<1xf32> to vector<1x1x1xf32>
    %29 = vector.extract %28[0, 0, 0] : f32 from vector<1x1x1xf32>
    %30 = vector.broadcast %29 : f32 to vector<1x8x128xf32>
    %c0_9 = arith.constant 0 : index
    %c0_10 = arith.constant 0 : index
    %c0_11 = arith.constant 0 : index
    %31 = vector.load %arg3[%c0_9, %c0_10, %c0_11] : memref<1x8x128xf32, #tpu.memory_space<vmem>>, vector<1x8x128xf32>
    tpu.vector_store %arg3[%c0_9, %c0_10, %c0_11], %30 {strides = array<i32>} : memref<1x8x128xf32, #tpu.memory_space<vmem>>, vector<1x8x128xf32>,
    return
  }
  func.func @transform_0(%arg0: i32) -> (i32, i32) {
    %c0_i32 = arith.constant 0 : i32
    %c0_i32_0 = arith.constant 0 : i32
    return %arg0, %c0_i32 : i32, i32
  }
  func.func @transform_1(%arg0: i32) -> (i32, i32) {
    %c0_i32 = arith.constant 0 : i32
    %c0_i32_0 = arith.constant 0 : i32
    return %arg0, %c0_i32 : i32, i32
  }
  func.func @transform_2(%arg0: i32) -> (i32, i32, i32) {
    %c0_i32 = arith.constant 0 : i32
    %c0_i32_0 = arith.constant 0 : i32
    %c0_i32_1 = arith.constant 0 : i32
    return %arg0, %c0_i32, %c0_i32_0 : i32, i32, i32
  }
}

</mosaic_0001>

<llo_original>
// kernel: tpu_custom_call.1
$region0: #{tpu_custom_call.1}
  #allocation0 [shape = 'u32[]', space=smem, size = 0x4, offset = 0x4, fixed_abs, tag = 'smem constant byte address 0x4 - core index']
  #allocation1 [shape = 'u32[144,128]{1,0:T(1,128)}', space=vmem, size = 0x12000, scoped, tag = 'internal scratch']
  %s0 = inlined_call_operand.vmem [shape: f32[60,128], index: 0, kind: input, shape index: {}]
  %s1 = inlined_call_operand.vmem [shape: s32[60,1], index: 1, kind: input, shape index: {}]
  %s2 = inlined_call_operand.hbm [shape: f32[4,8,128], index: 2, kind: output, shape index: {}]
  %s3 = sld [smem:[#allocation0]]
  $region41: #{tpu_custom_call.1} parent=0
    _
  %s5 = ssub.s32 1, %s3
  %s6 = scalar_select 0, %s5, %s3
  $region1: #{tpu_custom_call.1} parent=0
    #allocation2 [shape = 'u8[8192]{0}', space=vmem, size = 0x2000, scoped, tag = 'output window, operand 0']
    #allocation3 [shape = 's32[2]{0}', space=sflag, size = 0x8, scoped, tag = 'scoped memory for tpu_custom_call.1']
    %7 = vsyncpa [#allocation3], 0
    %s8 = scalar_lea.sflag [#allocation3], 1
    %9 = vsyncpa %s8, 0
    loop: start=0, step=1, limit=6
    $region2: #{tpu_custom_call.1} parent=1 // loop_pre_header
      _
    $region3: #{tpu_custom_call.1} parent=1 // loop_header
      %s11 = sphi 0, %s15
      %p12 = scmp.ge.s32.totalorder %s11, 6
      %s21 = sphi 0, %s23
      %s24 = sphi 0, %s21
      %s25 = sphi 0, %s24
      %s41 = sphi 0, %s25
      %s47 = sphi 0, %s49
      %s50 = sphi 0, %s47
      %s51 = sphi 0, %s50
      %s67 = sphi 0, %s51
      %s73 = sphi 0, %s75
      %s76 = sphi 0, %s73
      %s77 = sphi 0, %s76
      %s93 = sphi 0, %s77
    $region4: #{tpu_custom_call.1} parent=1 // loop_header_branch
      %14 = sbr.rel (%p12) target = $region8
    $region5: #{tpu_custom_call.1} parent=1 // loop_body
      %s16 = ssub.s32 %s11, 1
      %s17 = ssub.s32 %s11, 2
      %s18 = sadd.s32 %s11, 1
      %s19 = ssub.s32 %s11, %s18
      %p20 = scmp.eq.s32.totalorder %s19, 0
      %s22 = sadd.s32 %s21, 1
      %s23 = scalar_select %p20, %s21, %s22
      %p26 = pneg %p20
      %p27 = scmp.eq.s32.totalorder %s11, 3
      %p28 = por %p26, %p27
      %p29 = scmp.ne.s32.totalorder %s21, %s24
      %p30 = scmp.eq.s32.totalorder %s11, 0
      %p31 = por %p29, %p30
      %p32 = scmp.ne.s32.totalorder %s21, %s24
      %p33 = scmp.eq.s32.totalorder %s16, 3
      %p34 = por %p32, %p33
      %p35 = scmp.ne.s32.totalorder %s24, %s25
      %p36 = scmp.eq.s32.totalorder %s16, 0
      %p37 = por %p35, %p36
      %p38 = scmp.ne.s32.totalorder %s24, %s25
      %p39 = scmp.eq.s32.totalorder %s17, 3
      %p40 = por %p38, %p39
      %p42 = scmp.ne.s32.totalorder %s25, %s41
      %p43 = scmp.eq.s32.totalorder %s17, 0
      %p44 = por %p42, %p43
      %s45 = ssub.s32 %s11, %s18
      %p46 = scmp.eq.s32.totalorder %s45, 0
      %s48 = sadd.s32 %s47, 1
      %s49 = scalar_select %p46, %s47, %s48
      %p52 = pneg %p46
      %p53 = scmp.eq.s32.totalorder %s11, 3
      %p54 = por %p52, %p53
      %p55 = scmp.ne.s32.totalorder %s47, %s50
      %p56 = scmp.eq.s32.totalorder %s11, 0
      %p57 = por %p55, %p56
      %p58 = scmp.ne.s32.totalorder %s47, %s50
      %p59 = scmp.eq.s32.totalorder %s16, 3
      %p60 = por %p58, %p59
      %p61 = scmp.ne.s32.totalorder %s50, %s51
      %p62 = scmp.eq.s32.totalorder %s16, 0
      %p63 = por %p61, %p62
      %p64 = scmp.ne.s32.totalorder %s50, %s51
      %p65 = scmp.eq.s32.totalorder %s17, 3
      %p66 = por %p64, %p65
      %p68 = scmp.ne.s32.totalorder %s51, %s67
      %p69 = scmp.eq.s32.totalorder %s17, 0
      %p70 = por %p68, %p69
      %s71 = ssub.s32 %s11, %s18
      %p72 = scmp.eq.s32.totalorder %s71, 0
      %s74 = sadd.s32 %s73, 1
      %s75 = scalar_select %p72, %s73, %s74
      %p78 = pneg %p72
      %p79 = scmp.eq.s32.totalorder %s11, 3
      %p80 = por %p78, %p79
      %p81 = scmp.ne.s32.totalorder %s73, %s76
      %p82 = scmp.eq.s32.totalorder %s11, 0
      %p83 = por %p81, %p82
      %p84 = scmp.ne.s32.totalorder %s73, %s76
      %p85 = scmp.eq.s32.totalorder %s16, 3
      %p86 = por %p84, %p85
      %p87 = scmp.ne.s32.totalorder %s76, %s77
      %p88 = scmp.eq.s32.totalorder %s16, 0
      %p89 = por %p87, %p88
      %p90 = scmp.ne.s32.totalorder %s76, %s77
      %p91 = scmp.eq.s32.totalorder %s17, 3
      %p92 = por %p90, %p91
      %p94 = scmp.ne.s32.totalorder %s77, %s93
      %p95 = scmp.eq.s32.totalorder %s17, 0
      %p96 = por %p94, %p95
      %p97 = scmp.le.s32.totalorder 1, %s11
      %p98 = scmp.lt.s32.totalorder %s11, 5
      %p99 = pnand %p97, %p98
      %p100 = pneg %p99
      // Predicated region
      $region9: #{tpu_custom_call.1} parent=5 // pred_check
        _
      $region10: #{tpu_custom_call.1} parent=5 // pred_check_branch
        %102 = sbr.rel (%p99) target = $region12
      $region11: #{tpu_custom_call.1} parent=5 // pred_region
        %s103 = ssub.s32 %s11, 1
      $region12: #{tpu_custom_call.1} parent=5 // pred_fallthru
        _
      %p104 = scmp.lt.s32.totalorder %s11, 4
      // Predicated region
      $region13: #{tpu_custom_call.1} parent=5 // pred_check
        %p105 = pneg %p104
      $region14: #{tpu_custom_call.1} parent=5 // pred_check_branch
        %107 = sbr.rel (%p105) target = $region16
      $region15: #{tpu_custom_call.1} parent=5 // pred_region
        // Predicated region
        $region17: #{tpu_custom_call.1} parent=15 // pred_check
          %p108 = pneg %p31
        $region18: #{tpu_custom_call.1} parent=15 // pred_check_branch
          %110 = sbr.rel (%p108) target = $region20
        $region19: #{tpu_custom_call.1} parent=15 // pred_region
          %s111 = smul.u32 2, %s11
          %p112 = scmp.lt.s32.totalorder %s111, 7
          %s113 = scalar_select %p112, %s111, 7
          %s114 = smul.addr %s113, 8
          %s115 = scalar_lea.vmem %s0, %s114
          %s116 = smul.u32 2, %s11
        $region20: #{tpu_custom_call.1} parent=15 // pred_fallthru
          _
        // Predicated region
        $region21: #{tpu_custom_call.1} parent=15 // pred_check
          %p117 = pneg %p57
        $region22: #{tpu_custom_call.1} parent=15 // pred_check_branch
          %119 = sbr.rel (%p117) target = $region24
        $region23: #{tpu_custom_call.1} parent=15 // pred_region
          %s120 = smul.u32 2, %s11
          %p121 = scmp.lt.s32.totalorder %s120, 7
          %s122 = scalar_select %p121, %s120, 7
          %s123 = smul.addr %s122, 8
          %s124 = scalar_lea.vmem %s1, %s123
          %s125 = smul.u32 2, %s11
        $region24: #{tpu_custom_call.1} parent=15 // pred_fallthru
          _
      $region16: #{tpu_custom_call.1} parent=5 // pred_fallthru
        _
      %p126 = scmp.le.s32.totalorder 1, %s11
      %p127 = scmp.lt.s32.totalorder %s11, 5
      %p128 = pnand %p126, %p127
      %p129 = pneg %p128
      // Predicated region
      $region25: #{tpu_custom_call.1} parent=5 // pred_check
        _
      $region26: #{tpu_custom_call.1} parent=5 // pred_check_branch
        %131 = sbr.rel (%p128) target = $region28
      $region27: #{tpu_custom_call.1} parent=5 // pred_region
        %s132 = ssub.s32 %s11, 1
        %s133 = smul.u32 2, %s16
        %p134 = scmp.lt.s32.totalorder %s133, 7
        %s135 = scalar_select %p134, %s133, 7
        %s136 = smul.addr %s135, 8
        %s137 = scalar_lea.vmem %s0, %s136
        %p138 = pneg %p37
        %p139 = pneg %p34
        %s140 = smul.u32 2, %s16
        %p141 = scmp.lt.s32.totalorder %s140, 7
        %s142 = scalar_select %p141, %s140, 7
        %s143 = smul.addr %s142, 8
        %s144 = scalar_lea.vmem %s1, %s143
        %p145 = pneg %p63
        %p146 = pneg %p60
        %p147 = pneg %p89
        %p148 = pneg %p86
        %s149 = sand.u32 %s76, 1
        %s150 = scalar_lea.sflag [#allocation3], %s149
        %s151 = sand.u32 %s76, 1
        %s152 = smul.addr %s151, 8
        %s153 = scalar_lea.vmem [#allocation2], %s152
        %s154 = smul.u32 2, %s16
        %p155 = scmp.lt.s32.totalorder %s154, 7
        %s156 = scalar_select %p155, %s154, 7
        %s157 = smul.addr %s156, 8
        %s158 = scalar_lea.vmem %s0, %s157
        %s159 = smul.u32 2, %s16
        %s160 = smul.u32 2, %s16
        %p161 = scmp.lt.s32.totalorder %s160, 7
        %s162 = scalar_select %p161, %s160, 7
        %s163 = smul.addr %s162, 8
        %s164 = scalar_lea.vmem %s1, %s163
        %s165 = smul.u32 2, %s16
        %v166 = vld [vmem:[%s158] sm:$0xff]
        %v167 = vld [vmem:[%s158 + $0x8] sm:$0xff]
        %v168 = vld [vmem:[%s164] sm:$0xff]
        %v169 = vld [vmem:[%s164 + $0x8] sm:$0xff]
        %v170 = vlaneseq
        %v171 = vand.u32 %v170, 127
        %172 = vset.pattern.permute.xlu0 0
        %173 = vperm.xlu0 %172, %v168
        %v174 = vpop.permute.xlu0 %173
        %175 = vset.pattern.permute.xlu0 0
        %176 = vperm.xlu0 %175, %v169
        %v177 = vpop.permute.xlu0 %176
        %vm178 = vcmp.eq.s32.totalorder %v171, %v174
        %vm179 = vcmp.eq.s32.totalorder %v171, %v177
        %v180 = vsel %vm178, %v166, -inf
        %v181 = vsel %vm179, %v167, -inf
        %182 = vmax.xlane.f32.xlu0 %v180
        %v183 = vpop.xlane.xlu0 %182
        %184 = vmax.xlane.f32.xlu0 %v181
        %v185 = vpop.xlane.xlu0 %184
        %v186 = vsel %vm178, -inf, %v166
        %v187 = vsel %vm179, -inf, %v167
        %188 = vmax.xlane.f32.xlu0 %v186
        %v189 = vpop.xlane.xlu0 %188
        %190 = vmax.xlane.f32.xlu0 %v187
        %v191 = vpop.xlane.xlu0 %190
        %v192 = vadd.f32 %v189, 1.0
        %v193 = vadd.f32 %v191, 1.0
        %v194 = vmax.f32 %v192, %v183
        %v195 = vmax.f32 %v193, %v185
        %v196 = vsub.f32 %v194, %v183
        %v197 = vsub.f32 %v195, %v185
        %s198 = smul.u32 %s16, 16
        %v199 = vlaneseq
        %v200 = vshrl.u32 %v199, 7
        %v201 = vadd.s32 %v200, 8
        %v202 = vstv %s198
        %v203 = vadd.s32 %v202, %v200
        %v204 = vadd.s32 %v202, %v201
        %vm205 = vcmp.lt.s32.totalorder %v203, 60
        %vm206 = vcmp.lt.s32.totalorder %v204, 60
        %v207 = vsel %vm205, %v196, 0.0
        %v208 = vsel %vm206, %v197, 0.0
        %vm209 = vcmask 7168
        %v210 = vsel %vm209, %v207, 0.0
        %v211 = vsel %vm209, %v208, 0.0
        %v212 = vadd.f32 %v210, %v211
        %213 = vadd.xlane.f32.xlu0 %v212
        %v214 = vpop.xlane.xlu0 %213
        %v215 = vrot.slane %v214, 4
        %v216 = vadd.f32 %v214, %v215
        %v217 = vrot.slane %v216, 2
        %v218 = vadd.f32 %v216, %v217
        %v219 = vrot.slane %v218, 1
        %v220 = vadd.f32 %v218, %v219
        %s221 = vtos %v220
        %v222 = vstv %s221
        %223 = vst [vmem:[%s153] sm:$0xff] %v222
        %s224 = sand.u32 %s76, 1
        %s225 = scalar_lea.sflag [#allocation3], %s224
        %s226 = sand.u32 %s76, 1
        %s227 = smul.addr %s226, 8
        %s228 = scalar_lea.vmem [#allocation2], %s227
        // Predicated region
        $region29: #{tpu_custom_call.1} parent=27 // pred_check
          %p229 = pneg %p86
        $region30: #{tpu_custom_call.1} parent=27 // pred_check_branch
          %231 = sbr.rel (%p229) target = $region32
        $region31: #{tpu_custom_call.1} parent=27 // pred_region
          %s233 = ssub.s32 128, 128
          %234 = vsyncadd %s225, %s233
          %s235 = smul.addr %s16, 128
          %s236 = scalar_lea.hbm %s2, %s235
          %s238 = sshll.u32 %s228, 4
          %s239 = int_to_ptr.vmem [resolvable:$true] %s238
          %241 = dma.vmem_to_hbm [thread:$0]  %s239, 128, %s236, %s225
        $region32: #{tpu_custom_call.1} parent=27 // pred_fallthru
          _
      $region28: #{tpu_custom_call.1} parent=5 // pred_fallthru
        _
      %p242 = scmp.le.s32.totalorder 2, %s11
      // Predicated region
      $region33: #{tpu_custom_call.1} parent=5 // pred_check
        %p243 = pneg %p242
      $region34: #{tpu_custom_call.1} parent=5 // pred_check_branch
        %245 = sbr.rel (%p243) target = $region36
      $region35: #{tpu_custom_call.1} parent=5 // pred_region
        %s246 = ssub.s32 %s11, 2
        // Predicated region
        $region37: #{tpu_custom_call.1} parent=35 // pred_check
          %p247 = pneg %p92
        $region38: #{tpu_custom_call.1} parent=35 // pred_check_branch
          %249 = sbr.rel (%p247) target = $region40
        $region39: #{tpu_custom_call.1} parent=35 // pred_region
          %s250 = sand.u32 %s77, 1
          %s251 = scalar_lea.sflag [#allocation3], %s250
          %s252 = sand.u32 %s77, 1
          %s253 = smul.addr %s252, 8
          %s254 = scalar_lea.vmem [#allocation2], %s253
          %255 = dma.done %s251, 128
        $region40: #{tpu_custom_call.1} parent=35 // pred_fallthru
          _
      $region36: #{tpu_custom_call.1} parent=5 // pred_fallthru
        _
    $region6: #{tpu_custom_call.1} parent=1 // loop_footer
      %s15 = sadd.s32 1, %s11
    $region7: #{tpu_custom_call.1} parent=1 // loop_footer_branch
      %10 = sbr.rel target = $region3
    $region8: #{tpu_custom_call.1} parent=1 // loop_exit
      _
    %256 = vsyncpa [#allocation3], 1
    %s257 = scalar_lea.sflag [#allocation3], 1
    %258 = vsyncpa %s257, 1

</llo_original>
